<compile_context>
chip_gen: v7x
topology: tpu7x:2x2x1
jax: 0.10.0
libtpu: 0.0.40
codegen_flags: <defaults>
</compile_context>

<pallas_src>
import functools

import jax
import jax.numpy as jnp
from jax.experimental import pallas as pl
from jax.experimental.pallas import tpu as pltpu

_SUBLANE = 16  # bf16 sublane packing: keep batch tiles a multiple of 16 rows


def _cdiv(a, b):
    return (a + b - 1) // b


def _round_up(x, m):
    return _cdiv(x, m) * m


def _mlp_kernel(obs_ref, w0_ref, b0_ref, w1_ref, b1_ref, w2_ref, b2_ref,
                mean_ref, *, act_dtype):
    """[Linear -> tanh] x 2 -> Linear on one batch tile (MXU, f32 accumulate)."""
    # Layer 0: Linear + tanh (tanh runs in act_dtype: bf16 on v6e/v7x, f32 on v5e).
    h = jnp.tanh(
        (jnp.dot(obs_ref[...], w0_ref[...], preferred_element_type=jnp.float32)
         + b0_ref[...]).astype(act_dtype)
    ).astype(w1_ref.dtype)
    # Layer 1: Linear + tanh
    h = jnp.tanh(
        (jnp.dot(h, w1_ref[...], preferred_element_type=jnp.float32)
         + b1_ref[...]).astype(act_dtype)
    ).astype(w2_ref.dtype)
    # Output layer (identity activation). Narrow (tb, ac_dim) store: masked vst inside
    # VMEM, but ~32x less HBM writeback than a 128-lane-padded f32 output.
    mean_ref[...] = (
        jnp.dot(h, w2_ref[...], preferred_element_type=jnp.float32) + b2_ref[...]
    ).astype(mean_ref.dtype)


def _default_act_dtype(compute_dtype):
    """bf16 tanh only where the VPU/EUP have a bf16 path (v6e / v7x); f32 otherwise."""
    if compute_dtype != jnp.bfloat16:
        return jnp.float32
    try:
        kind = jax.devices()[0].device_kind.lower()
    except Exception:  # no device info -> safe default
        return jnp.float32
    return jnp.bfloat16 if ("v6" in kind or "v7" in kind) else jnp.float32


def mlp_policy_forward(obs, params, logstd, *, block_b=8192,
                       compute_dtype=jnp.bfloat16, act_dtype=None):
    """Returns (b_mean, scale_tril) parameterizing the MultivariateNormal action dist.

    scale_tril is the un-broadcast (ac_dim, ac_dim) lower-triangular factor; consumers
    broadcast it over the batch lazily (what torch's MultivariateNormal does internally).
    """
    w0, b0, w1, b1, w2, b2 = params
    B, ob_dim = obs.shape
    ac_dim = w2.shape[1]

    if act_dtype is None:
        act_dtype = _default_act_dtype(compute_dtype)

    # bf16 DMA / MXU path; biases and accumulation stay f32.
    obs_c = obs.astype(compute_dtype)
    w0c, w1c, w2c = (w.astype(compute_dtype) for w in (w0, w1, w2))
    b0f, b1f, b2f = (b.astype(jnp.float32) for b in (b0, b1, b2))

    # Batch tiling: multiple-of-16 tiles, sized to minimize last-tile padding, and
    # >=2 grid blocks whenever the batch is splittable (v7x has 2 TensorCores).
    b_aligned = _round_up(max(B, 1), _SUBLANE)
    n_blocks = _cdiv(b_aligned, block_b)
    if b_aligned >= 2 * _SUBLANE:
        n_blocks = max(n_blocks, 2)
    tb = _round_up(_cdiv(b_aligned, n_blocks), _SUBLANE)
    n_blocks = _cdiv(b_aligned, tb)
    b_padded = n_blocks * tb
    if b_padded != B:
        obs_c = jnp.pad(obs_c, ((0, b_padded - B), (0, 0)))

    # Weights/biases: full-array blocks with constant index_maps -> VMEM-resident
    # across the batch grid (no re-DMA per step).
    def const(shape):
        nd = len(shape)
        return pl.BlockSpec(shape, lambda i, _nd=nd: (0,) * _nd)

    kernel = functools.partial(_mlp_kernel, act_dtype=act_dtype)

    mean_out = pl.pallas_call(
        kernel,
        out_shape=jax.ShapeDtypeStruct((b_padded, ac_dim), jnp.float32),
        grid_spec=pltpu.PrefetchScalarGridSpec(
            num_scalar_prefetch=0,
            grid=(n_blocks,),
            in_specs=[
                pl.BlockSpec((tb, ob_dim), lambda i: (i, 0)),
                const(w0c.shape), const(b0f.shape),
                const(w1c.shape), const(b1f.shape),
                const(w2c.shape), const(b2f.shape),
            ],
            out_specs=pl.BlockSpec((tb, ac_dim), lambda i: (i, 0)),
        ),
        compiler_params=pltpu.CompilerParams(
            dimension_semantics=("parallel",),
        ),
    )(obs_c, w0c, b0f, w1c, b1f, w2c, b2f)

    b_mean = mean_out[:B] if b_padded != B else mean_out

    # scale_tril = diag(exp(logstd)); NOT materialized per-batch (pure bandwidth waste —
    # MultivariateNormal broadcasts it lazily).
    scale_tril = jnp.diag(jnp.exp(logstd))

    # TODO(synk): torch.distributions.MultivariateNormal (sampling / log_prob) has no
    # Pallas equivalent; we return its parameters (mean, scale_tril) instead.
    return b_mean, scale_tril


def init_params(key, ob_dim, hidden, ac_dim):
    """Deterministic init mimicking build_mlp: 2 hidden tanh layers + linear output."""
    ks = jax.random.split(key, 6)

    def linear(kw, kb, fan_in, fan_out):
        bound = 1.0 / jnp.sqrt(fan_in)
        w = jax.random.uniform(kw, (fan_in, fan_out), jnp.float32, -bound, bound)
        b = jax.random.uniform(kb, (1, fan_out), jnp.float32, -bound, bound)
        return w, b

    w0, b0 = linear(ks[0], ks[1], ob_dim, hidden)
    w1, b1 = linear(ks[2], ks[3], hidden, hidden)
    w2, b2 = linear(ks[4], ks[5], hidden, ac_dim)
    return (w0, b0, w1, b1, w2, b2)


if __name__ == "__main__":
    key = jax.random.PRNGKey(0)
    k_obs, k_params = jax.random.split(key)

    B, ob_dim, hidden, ac_dim = 2, 16, 32, 4

    obs = jax.random.normal(k_obs, (B, ob_dim), jnp.float32)
    params = init_params(k_params, ob_dim, hidden, ac_dim)
    logstd = jnp.zeros((ac_dim,), jnp.float32)  # nn.Parameter(torch.zeros(ac_dim))

    b_mean, scale_tril = mlp_policy_forward(obs, params, logstd)
    jax.block_until_ready((b_mean, scale_tril))

    # Pure-JAX reference along the same bf16-weight / f32-accumulate path.
    w0, b0, w1, b1, w2, b2 = params
    bf = jnp.bfloat16
    h = jnp.tanh(jnp.dot(obs.astype(bf), w0.astype(bf),
                         preferred_element_type=jnp.float32) + b0)
    h = jnp.tanh(jnp.dot(h.astype(bf), w1.astype(bf),
                         preferred_element_type=jnp.float32) + b1)
    ref_mean = jnp.dot(h.astype(bf), w2.astype(bf),
                       preferred_element_type=jnp.float32) + b2

    assert b_mean.shape == (B, ac_dim)
    assert jnp.allclose(b_mean, ref_mean, atol=1e-2, rtol=1e-2)
    assert scale_tril.shape == (ac_dim, ac_dim)

    # Consumers broadcast lazily (what MultivariateNormal does with the repeated tril).
    b_scale_tril = jnp.broadcast_to(scale_tril, (B, ac_dim, ac_dim))
    assert b_scale_tril.shape == (B, ac_dim, ac_dim)

    print("KERNEL_OK")
</pallas_src>

<mosaic_0001>
module attributes {stable_mosaic.version = 11 : i64} {
  func.func @_mlp_kernel(%arg0: i32, %arg1: memref<16x16xbf16, #tpu.memory_space<vmem>>, %arg2: memref<16x32xbf16, #tpu.memory_space<vmem>>, %arg3: memref<1x32xf32, #tpu.memory_space<vmem>>, %arg4: memref<32x32xbf16, #tpu.memory_space<vmem>>, %arg5: memref<1x32xf32, #tpu.memory_space<vmem>>, %arg6: memref<32x4xbf16, #tpu.memory_space<vmem>>, %arg7: memref<1x4xf32, #tpu.memory_space<vmem>>, %arg8: memref<16x4xf32, #tpu.memory_space<vmem>>) attributes {dimension_semantics = [#tpu.dimension_semantics<parallel>], iteration_bounds = array<i64: 1>, scalar_prefetch = 0 : i64, scratch_operands = 0 : i64, tpu.core_type = #tpu.core_type<tc>, window_params = [{transform_indices = @transform_0, window_bounds = array<i64: 16, 16>}, {pipeline_mode = #tpu.pipeline_mode<synchronous>, transform_indices = @transform_1, window_bounds = array<i64: 16, 32>}, {pipeline_mode = #tpu.pipeline_mode<synchronous>, transform_indices = @transform_2, window_bounds = array<i64: 1, 32>}, {pipeline_mode = #tpu.pipeline_mode<synchronous>, transform_indices = @transform_3, window_bounds = array<i64: 32, 32>}, {pipeline_mode = #tpu.pipeline_mode<synchronous>, transform_indices = @transform_4, window_bounds = array<i64: 1, 32>}, {pipeline_mode = #tpu.pipeline_mode<synchronous>, transform_indices = @transform_5, window_bounds = array<i64: 32, 4>}, {pipeline_mode = #tpu.pipeline_mode<synchronous>, transform_indices = @transform_6, window_bounds = array<i64: 1, 4>}, {transform_indices = @transform_7, window_bounds = array<i64: 16, 4>}]} {
    %c0 = arith.constant 0 : index
    %c0_0 = arith.constant 0 : index
    %0 = vector.load %arg1[%c0, %c0_0] : memref<16x16xbf16, #tpu.memory_space<vmem>>, vector<16x16xbf16>
    %c0_1 = arith.constant 0 : index
    %c0_2 = arith.constant 0 : index
    %1 = vector.load %arg2[%c0_1, %c0_2] : memref<16x32xbf16, #tpu.memory_space<vmem>>, vector<16x32xbf16>
    %cst = arith.constant dense<0.000000e+00> : vector<16x32xf32>
    %2 = tpu.matmul %0, %1, %cst {dimension_numbers = #tpu.dot_dimension_numbers<[1], [0], [0], [1], [0, 0, 1, 1], [], []>} : vector<16x16xbf16>, vector<16x32xbf16>, vector<16x32xf32> -> vector<16x32xf32>
    %c0_3 = arith.constant 0 : index
    %c0_4 = arith.constant 0 : index
    %3 = vector.load %arg3[%c0_3, %c0_4] : memref<1x32xf32, #tpu.memory_space<vmem>>, vector<1x32xf32>
    %4 = vector.broadcast %3 : vector<1x32xf32> to vector<16x32xf32>
    %5 = arith.addf %2, %4 : vector<16x32xf32>
    %6 = math.tanh %5 : vector<16x32xf32>
    %7 = arith.truncf %6 : vector<16x32xf32> to vector<16x32xbf16>
    %c0_5 = arith.constant 0 : index
    %c0_6 = arith.constant 0 : index
    %8 = vector.load %arg4[%c0_5, %c0_6] : memref<32x32xbf16, #tpu.memory_space<vmem>>, vector<32x32xbf16>
    %cst_7 = arith.constant dense<0.000000e+00> : vector<16x32xf32>
    %9 = tpu.matmul %7, %8, %cst_7 {dimension_numbers = #tpu.dot_dimension_numbers<[1], [0], [0], [1], [0, 0, 1, 1], [], []>} : vector<16x32xbf16>, vector<32x32xbf16>, vector<16x32xf32> -> vector<16x32xf32>
    %c0_8 = arith.constant 0 : index
    %c0_9 = arith.constant 0 : index
    %10 = vector.load %arg5[%c0_8, %c0_9] : memref<1x32xf32, #tpu.memory_space<vmem>>, vector<1x32xf32>
    %11 = vector.broadcast %10 : vector<1x32xf32> to vector<16x32xf32>
    %12 = arith.addf %9, %11 : vector<16x32xf32>
    %13 = math.tanh %12 : vector<16x32xf32>
    %14 = arith.truncf %13 : vector<16x32xf32> to vector<16x32xbf16>
    %c0_10 = arith.constant 0 : index
    %c0_11 = arith.constant 0 : index
    %15 = vector.load %arg6[%c0_10, %c0_11] : memref<32x4xbf16, #tpu.memory_space<vmem>>, vector<32x4xbf16>
    %cst_12 = arith.constant dense<0.000000e+00> : vector<16x4xf32>
    %16 = tpu.matmul %14, %15, %cst_12 {dimension_numbers = #tpu.dot_dimension_numbers<[1], [0], [0], [1], [0, 0, 1, 1], [], []>} : vector<16x32xbf16>, vector<32x4xbf16>, vector<16x4xf32> -> vector<16x4xf32>
    %c0_13 = arith.constant 0 : index
    %c0_14 = arith.constant 0 : index
    %17 = vector.load %arg7[%c0_13, %c0_14] : memref<1x4xf32, #tpu.memory_space<vmem>>, vector<1x4xf32>
    %18 = vector.broadcast %17 : vector<1x4xf32> to vector<16x4xf32>
    %19 = arith.addf %16, %18 : vector<16x4xf32>
    %c0_15 = arith.constant 0 : index
    %c0_16 = arith.constant 0 : index
    %20 = vector.load %arg8[%c0_15, %c0_16] : memref<16x4xf32, #tpu.memory_space<vmem>>, vector<16x4xf32>
    tpu.vector_store %arg8[%c0_15, %c0_16], %19 {strides = array<i32>} : memref<16x4xf32, #tpu.memory_space<vmem>>, vector<16x4xf32>,
    return
  }
  func.func @transform_0(%arg0: i32) -> (i32, i32) {
    %c0_i32 = arith.constant 0 : i32
    %c0_i32_0 = arith.constant 0 : i32
    return %arg0, %c0_i32 : i32, i32
  }
  func.func @transform_1(%arg0: i32) -> (i32, i32) {
    %c0_i32 = arith.constant 0 : i32
    %c0_i32_0 = arith.constant 0 : i32
    %c0_i32_1 = arith.constant 0 : i32
    return %c0_i32, %c0_i32_0 : i32, i32
  }
  func.func @transform_2(%arg0: i32) -> (i32, i32) {
    %c0_i32 = arith.constant 0 : i32
    %c0_i32_0 = arith.constant 0 : i32
    %c0_i32_1 = arith.constant 0 : i32
    return %c0_i32, %c0_i32_0 : i32, i32
  }
  func.func @transform_3(%arg0: i32) -> (i32, i32) {
    %c0_i32 = arith.constant 0 : i32
    %c0_i32_0 = arith.constant 0 : i32
    %c0_i32_1 = arith.constant 0 : i32
    return %c0_i32, %c0_i32_0 : i32, i32
  }
  func.func @transform_4(%arg0: i32) -> (i32, i32) {
    %c0_i32 = arith.constant 0 : i32
    %c0_i32_0 = arith.constant 0 : i32
    %c0_i32_1 = arith.constant 0 : i32
    return %c0_i32, %c0_i32_0 : i32, i32
  }
  func.func @transform_5(%arg0: i32) -> (i32, i32) {
    %c0_i32 = arith.constant 0 : i32
    %c0_i32_0 = arith.constant 0 : i32
    %c0_i32_1 = arith.constant 0 : i32
    return %c0_i32, %c0_i32_0 : i32, i32
  }
  func.func @transform_6(%arg0: i32) -> (i32, i32) {
    %c0_i32 = arith.constant 0 : i32
    %c0_i32_0 = arith.constant 0 : i32
    %c0_i32_1 = arith.constant 0 : i32
    return %c0_i32, %c0_i32_0 : i32, i32
  }
  func.func @transform_7(%arg0: i32) -> (i32, i32) {
    %c0_i32 = arith.constant 0 : i32
    %c0_i32_0 = arith.constant 0 : i32
    return %arg0, %c0_i32 : i32, i32
  }
}

</mosaic_0001>

<llo_original>
// kernel: tpu_custom_call.1
$region0: #{tpu_custom_call.1}
  #allocation0 [shape = 'u32[]', space=smem, size = 0x4, offset = 0x4, fixed_abs, tag = 'smem constant byte address 0x4 - core index']
  #allocation1 [shape = 'u32[144,128]{1,0:T(1,128)}', space=vmem, size = 0x12000, scoped, tag = 'internal scratch']
  %s0 = inlined_call_operand.vmem [shape: bf16[16,16], index: 0, kind: input, shape index: {}]
  %s1 = inlined_call_operand.hbm [shape: bf16[16,32], index: 1, kind: input, shape index: {}]
  %s2 = inlined_call_operand.vmem [shape: f32[1,32], index: 2, kind: input, shape index: {}]
  %s3 = inlined_call_operand.vmem [shape: bf16[32,32], index: 3, kind: input, shape index: {}]
  %s4 = inlined_call_operand.vmem [shape: f32[1,32], index: 4, kind: input, shape index: {}]
  %s5 = inlined_call_operand.vmem [shape: bf16[32,4], index: 5, kind: input, shape index: {}]
  %s6 = inlined_call_operand.vmem [shape: f32[1,4], index: 6, kind: input, shape index: {}]
  %s7 = inlined_call_operand.vmem [shape: f32[16,4], index: 7, kind: output, shape index: {}]
  %s8 = sld [smem:[#allocation0]]
  $region42: #{tpu_custom_call.1} parent=0
    _
  %s10 = ssub.s32 1, %s8
  %s11 = scalar_select 0, %s10, %s8
  $region1: #{tpu_custom_call.1} parent=0
    #allocation2 [shape = 'u8[4096]{0}', space=vmem, size = 0x1000, scoped, tag = 'input window, operand 1, single buffered']
    #allocation3 [shape = 's32[1]{0}', space=sflag, size = 0x4, scoped, tag = 'scoped memory for tpu_custom_call.1']
    %12 = vsyncpa [#allocation3], 0
    // Predicated region
    $region2: #{tpu_custom_call.1} parent=1 // pred_check
      _
    $region3: #{tpu_custom_call.1} parent=1 // pred_check_branch
      %14 = sbr.rel (0) target = $region5
    $region4: #{tpu_custom_call.1} parent=1 // pred_region
      _
    $region5: #{tpu_custom_call.1} parent=1 // pred_fallthru
      _
    // Predicated region
    $region6: #{tpu_custom_call.1} parent=1 // pred_check
      _
    $region7: #{tpu_custom_call.1} parent=1 // pred_check_branch
      %16 = sbr.rel (0) target = $region9
    $region8: #{tpu_custom_call.1} parent=1 // pred_region
      %s18 = ssub.s32 128, 128
      %19 = vsyncadd [#allocation3], %s18
      %s20 = sshll.u32 [#allocation2], 4
      %s21 = int_to_ptr.vmem [resolvable:$true] %s20
      %26 = dma.hbm_to_vmem [thread:$0]  %s1, 128, %s21, [#allocation3], 64, 64, 4
    $region9: #{tpu_custom_call.1} parent=1 // pred_fallthru
      _
    // Predicated region
    $region10: #{tpu_custom_call.1} parent=1 // pred_check
      _
    $region11: #{tpu_custom_call.1} parent=1 // pred_check_branch
      %28 = sbr.rel (0) target = $region13
    $region12: #{tpu_custom_call.1} parent=1 // pred_region
      _
    $region13: #{tpu_custom_call.1} parent=1 // pred_fallthru
      _
    // Predicated region
    $region14: #{tpu_custom_call.1} parent=1 // pred_check
      _
    $region15: #{tpu_custom_call.1} parent=1 // pred_check_branch
      %30 = sbr.rel (0) target = $region17
    $region16: #{tpu_custom_call.1} parent=1 // pred_region
      _
    $region17: #{tpu_custom_call.1} parent=1 // pred_fallthru
      _
    // Predicated region
    $region18: #{tpu_custom_call.1} parent=1 // pred_check
      _
    $region19: #{tpu_custom_call.1} parent=1 // pred_check_branch
      %32 = sbr.rel (0) target = $region21
    $region20: #{tpu_custom_call.1} parent=1 // pred_region
      _
    $region21: #{tpu_custom_call.1} parent=1 // pred_fallthru
      _
    // Predicated region
    $region22: #{tpu_custom_call.1} parent=1 // pred_check
      _
    $region23: #{tpu_custom_call.1} parent=1 // pred_check_branch
      %34 = sbr.rel (0) target = $region25
    $region24: #{tpu_custom_call.1} parent=1 // pred_region
      _
    $region25: #{tpu_custom_call.1} parent=1 // pred_fallthru
      _
    // Predicated region
    $region26: #{tpu_custom_call.1} parent=1 // pred_check
      _
    $region27: #{tpu_custom_call.1} parent=1 // pred_check_branch
      %36 = sbr.rel (0) target = $region29
    $region28: #{tpu_custom_call.1} parent=1 // pred_region
      _
    $region29: #{tpu_custom_call.1} parent=1 // pred_fallthru
      _
    // Predicated region
    $region30: #{tpu_custom_call.1} parent=1 // pred_check
      _
    $region31: #{tpu_custom_call.1} parent=1 // pred_check_branch
      %38 = sbr.rel (0) target = $region33
    $region32: #{tpu_custom_call.1} parent=1 // pred_region
      %39 = dma.done [#allocation3], 128
    $region33: #{tpu_custom_call.1} parent=1 // pred_fallthru
      _
    %v41 = vld [vmem:[%s0] sm:$0xf]
    %v42 = vld [vmem:[%s0 + $0x4] sm:$0xf]
    %v43 = vld [vmem:[#allocation2] sm:$0xf]
    %v44 = vld [vmem:[#allocation2 + $0x4] sm:$0xf]
    %v45 = vld [vmem:[%s2] sm:$0x1]
    %v47 = vlaneseq
    %v48 = vshrl.u32 %v47, 7
    %v49 = vsub.s32 0, %v48
    %v50 = vrot.slane %v45, %v49
    %v54 = vunpack.c.l.b16 %v41
    %v55 = vunpack.c.l.b16 %v42
    %v56 = vpack.c.b16 %v55, %v54
    %v59 = vunpack.c.l.b16 %v43
    %v60 = vunpack.c.l.b16 %v44
    %v61 = vpack.c.b16 %v60, %v59
    %vm63 = vcmask 130048
    %v65 = vsel %vm63, %v56, 0
    %67 = vmatprep.subr.bf16.mxu0 0
    %68 = vmatpush1.bf16.msra.mxu0 %v61
    %69 = vmatprep.subr.bf16.mxu0 0
    %70 = vmatpush1.bf16.msra.mxu0 0
    %71 = vmatprep.subr.bf16.mxu0 0
    %72 = vmatpush1.bf16.msra.mxu0 0
    %73 = vmatprep.subr.bf16.mxu0 0
    %74 = vmatpush1.bf16.msra.mxu0 0
    %75 = vmatprep.subr.bf16.mxu0 0
    %76 = vmatpush1.bf16.msra.mxu0 0
    %77 = vmatprep.subr.bf16.mxu0 0
    %78 = vmatpush1.bf16.msra.mxu0 0
    %79 = vmatprep.subr.bf16.mxu0 0
    %80 = vmatpush1.bf16.msra.mxu0 0
    %81 = vmatprep.subr.bf16.mxu0 0
    %82 = vmatpush1.bf16.msra.mxu0 0
    %83 = vmatprep.subr.bf16.mxu0 0
    %84 = vmatpush1.bf16.msra.mxu0 0
    %85 = vmatprep.subr.bf16.mxu0 0
    %86 = vmatpush1.bf16.msra.mxu0 0
    %87 = vmatprep.subr.bf16.mxu0 0
    %88 = vmatpush1.bf16.msra.mxu0 0
    %89 = vmatprep.subr.bf16.mxu0 0
    %90 = vmatpush1.bf16.msra.mxu0 0
    %91 = vmatprep.subr.bf16.mxu0 0
    %92 = vmatpush1.bf16.msra.mxu0 0
    %93 = vmatprep.subr.bf16.mxu0 0
    %94 = vmatpush1.bf16.msra.mxu0 0
    %95 = vmatprep.subr.bf16.mxu0 0
    %96 = vmatpush1.bf16.msra.mxu0 0
    %97 = vmatprep.subr.bf16.mxu0 0
    %98 = vmatpush1.bf16.msra.mxu0 0
    %99 = vmatprep.mubr.bf16.mxu0 0
    %100 = vmatmul.mubr.bf16.gmra.mrb[0].mxu0 %v65
    %v101 = vpop.f32.mrb[0].mxu0
    %v102 = vadd.f32 %v50, %v101
    %v103 = vpop.f32.mrb[0].mxu0
    %v104 = vpop.f32.mrb[0].mxu0
    %v105 = vadd.f32 %v50, %v104
    %v106 = vpop.f32.mrb[0].mxu0
    %107 = vdwg.mxu0
    %v108 = vtanh.pop %v102
    %v109 = vtanh.pop %v105
    %v110 = vpack.c.bf16 %v109, %v108
    %v111 = vld [vmem:[%s3] sm:$0xf]
    %v112 = vld [vmem:[%s3 + $0x4] sm:$0xf]
    %v113 = vld [vmem:[%s3 + $0x8] sm:$0xf]
    %v114 = vld [vmem:[%s3 + $0xc] sm:$0xf]
    %v115 = vld [vmem:[%s4] sm:$0x1]
    %v117 = vlaneseq
    %v118 = vshrl.u32 %v117, 7
    %v119 = vsub.s32 0, %v118
    %v120 = vrot.slane %v115, %v119
    %v126 = vunpack.c.l.b16 %v111
    %v127 = vunpack.c.l.b16 %v112
    %v128 = vunpack.c.l.b16 %v113
    %v129 = vunpack.c.l.b16 %v114
    %v130 = vpack.c.b16 %v127, %v126
    %v131 = vpack.c.b16 %v129, %v128
    %vm134 = vcmask 261120
    %v136 = vsel %vm134, %v110, 0
    %138 = vmatprep.subr.bf16.mxu0 0
    %139 = vmatpush1.bf16.msra.mxu0 %v130
    %140 = vmatprep.subr.bf16.mxu0 0
    %141 = vmatpush1.bf16.msra.mxu0 %v131
    %142 = vmatprep.subr.bf16.mxu0 0
    %143 = vmatpush1.bf16.msra.mxu0 0
    %144 = vmatprep.subr.bf16.mxu0 0
    %145 = vmatpush1.bf16.msra.mxu0 0
    %146 = vmatprep.subr.bf16.mxu0 0
    %147 = vmatpush1.bf16.msra.mxu0 0
    %148 = vmatprep.subr.bf16.mxu0 0
    %149 = vmatpush1.bf16.msra.mxu0 0
    %150 = vmatprep.subr.bf16.mxu0 0
    %151 = vmatpush1.bf16.msra.mxu0 0
    %152 = vmatprep.subr.bf16.mxu0 0
    %153 = vmatpush1.bf16.msra.mxu0 0
    %154 = vmatprep.subr.bf16.mxu0 0
    %155 = vmatpush1.bf16.msra.mxu0 0
    %156 = vmatprep.subr.bf16.mxu0 0
    %157 = vmatpush1.bf16.msra.mxu0 0
    %158 = vmatprep.subr.bf16.mxu0 0
    %159 = vmatpush1.bf16.msra.mxu0 0
    %160 = vmatprep.subr.bf16.mxu0 0
    %161 = vmatpush1.bf16.msra.mxu0 0
    %162 = vmatprep.subr.bf16.mxu0 0
    %163 = vmatpush1.bf16.msra.mxu0 0
    %164 = vmatprep.subr.bf16.mxu0 0
    %165 = vmatpush1.bf16.msra.mxu0 0
    %166 = vmatprep.subr.bf16.mxu0 0
    %167 = vmatpush1.bf16.msra.mxu0 0
    %168 = vmatprep.subr.bf16.mxu0 0
    %169 = vmatpush1.bf16.msra.mxu0 0
    %170 = vmatprep.mubr.bf16.mxu0 0
    %171 = vmatmul.mubr.bf16.gmra.mrb[0].mxu0 %v136
    %v172 = vpop.f32.mrb[0].mxu0
    %v173 = vadd.f32 %v120, %v172
    %v174 = vpop.f32.mrb[0].mxu0
    %v175 = vpop.f32.mrb[0].mxu0
    %v176 = vadd.f32 %v120, %v175
    %v177 = vpop.f32.mrb[0].mxu0
    %178 = vdwg.mxu0
    %v179 = vtanh.pop %v173
    %v180 = vtanh.pop %v176
    %v181 = vpack.c.bf16 %v180, %v179
    %v182 = vld [vmem:[%s5] sm:$0xf]
    %v183 = vld [vmem:[%s5 + $0x4] sm:$0xf]
    %v184 = vld [vmem:[%s5 + $0x8] sm:$0xf]
    %v185 = vld [vmem:[%s5 + $0xc] sm:$0xf]
    %v186 = vld [vmem:[%s6] sm:$0x1]
    %v188 = vlaneseq
    %v189 = vshrl.u32 %v188, 7
    %v190 = vsub.s32 0, %v189
    %v191 = vrot.slane %v186, %v190
    %v197 = vunpack.c.l.b16 %v182
    %v198 = vunpack.c.l.b16 %v183
    %v199 = vunpack.c.l.b16 %v184
    %v200 = vunpack.c.l.b16 %v185
    %v201 = vpack.c.b16 %v198, %v197
    %v202 = vpack.c.b16 %v200, %v199
    %v206 = vsel %vm134, %v181, 0
    %208 = vmatprep.subr.bf16.mxu0 0
    %209 = vmatpush1.bf16.msra.mxu0 %v201
    %210 = vmatprep.subr.bf16.mxu0 0
    %211 = vmatpush1.bf16.msra.mxu0 %v202
    %212 = vmatprep.subr.bf16.mxu0 0
    %213 = vmatpush1.bf16.msra.mxu0 0
    %214 = vmatprep.subr.bf16.mxu0 0
    %215 = vmatpush1.bf16.msra.mxu0 0
    %216 = vmatprep.subr.bf16.mxu0 0
    %217 = vmatpush1.bf16.msra.mxu0 0
    %218 = vmatprep.subr.bf16.mxu0 0
    %219 = vmatpush1.bf16.msra.mxu0 0
    %220 = vmatprep.subr.bf16.mxu0 0
    %221 = vmatpush1.bf16.msra.mxu0 0
    %222 = vmatprep.subr.bf16.mxu0 0
    %223 = vmatpush1.bf16.msra.mxu0 0
    %224 = vmatprep.subr.bf16.mxu0 0
    %225 = vmatpush1.bf16.msra.mxu0 0
    %226 = vmatprep.subr.bf16.mxu0 0
    %227 = vmatpush1.bf16.msra.mxu0 0
    %228 = vmatprep.subr.bf16.mxu0 0
    %229 = vmatpush1.bf16.msra.mxu0 0
    %230 = vmatprep.subr.bf16.mxu0 0
    %231 = vmatpush1.bf16.msra.mxu0 0
    %232 = vmatprep.subr.bf16.mxu0 0
    %233 = vmatpush1.bf16.msra.mxu0 0
    %234 = vmatprep.subr.bf16.mxu0 0
    %235 = vmatpush1.bf16.msra.mxu0 0
    %236 = vmatprep.subr.bf16.mxu0 0
    %237 = vmatpush1.bf16.msra.mxu0 0
    %238 = vmatprep.subr.bf16.mxu0 0
    %239 = vmatpush1.bf16.msra.mxu0 0
    %240 = vmatprep.mubr.bf16.mxu0 0
    %241 = vmatmul.mubr.bf16.gmra.mrb[0].mxu0 %v206
    %v242 = vpop.f32.mrb[0].mxu0
    %v243 = vadd.f32 %v191, %v242
    %v244 = vpop.f32.mrb[0].mxu0
    %v245 = vpop.f32.mrb[0].mxu0
    %v246 = vadd.f32 %v191, %v245
    %v247 = vpop.f32.mrb[0].mxu0
    %248 = vdwg.mxu0
    %vm249 = vcmask 31744
    %250 = vst.msk [vmem:[%s7] sm:$0xff] %vm249, %v243
    %251 = vst.msk [vmem:[%s7 + $0x8] sm:$0xff] %vm249, %v246
    // Predicated region
    $region34: #{tpu_custom_call.1} parent=1 // pred_check
      _
    $region35: #{tpu_custom_call.1} parent=1 // pred_check_branch
      %253 = sbr.rel (0) target = $region37
    $region36: #{tpu_custom_call.1} parent=1 // pred_region
      _
    $region37: #{tpu_custom_call.1} parent=1 // pred_fallthru
      _
    // Predicated region
    $region38: #{tpu_custom_call.1} parent=1 // pred_check
      _
    $region39: #{tpu_custom_call.1} parent=1 // pred_check_branch
      %255 = sbr.rel (0) target = $region41
    $region40: #{tpu_custom_call.1} parent=1 // pred_region
      _
    $region41: #{tpu_custom_call.1} parent=1 // pred_fallthru
      _
    %256 = vsyncpa [#allocation3], 1

</llo_original>
